<compile_context>
chip_gen: v7x
topology: tpu7x:2x2x1
jax: 0.10.0
libtpu: 0.0.40
codegen_flags: <defaults>
</compile_context>

<pallas_src>
import functools

import jax
import jax.numpy as jnp
from jax.experimental import pallas as pl
from jax.experimental.pallas import tpu as pltpu


def _round_up(x, m):
    return ((x + m - 1) // m) * m


def _lane_encoder_kernel(lanes_ref, table_ref, out_ref, *, n_keep, r_vocab, l_vocab):
    """One grid step encodes a [TN, ...] block of lanes.

    lanes_ref : [TN, F]      float  (raw Lane rows; last two cols are ids)
    table_ref : [R + L, E]   float  stacked road/lane embedding tables
    out_ref   : [TN, n_keep+E]
    """
    lanes = lanes_ref[...]
    tn = lanes.shape[0]
    rl = r_vocab + l_vocab

    # torch: lanes[:, -2].to(int), lanes[:, -1].to(int).
    # nn.Embedding would error on out-of-range ids; here they are clamped,
    # which also makes the undefined rows of a ragged last block harmless.
    road_ids = jnp.clip(lanes[:, n_keep:n_keep + 1].astype(jnp.int32), 0, r_vocab - 1)
    lane_ids = jnp.clip(lanes[:, n_keep + 1:n_keep + 2].astype(jnp.int32),
                        0, l_vocab - 1) + r_vocab

    # Combined one-hot over the stacked table: exactly two ones per row
    # (road slot, offset lane slot) -> one MXU dot gives road_emb + lane_emb.
    iota = jax.lax.broadcasted_iota(jnp.int32, (tn, rl), 1)
    one_hot = ((road_ids == iota) | (lane_ids == iota)).astype(table_ref.dtype)
    id_emb = jnp.dot(one_hot, table_ref[...], preferred_element_type=jnp.float32)

    # torch.cat((lanes[:, :-2], id_emb), dim=1) as two static-slice stores.
    out_ref[:, :n_keep] = lanes[:, :n_keep].astype(out_ref.dtype)
    out_ref[:, n_keep:] = id_emb.astype(out_ref.dtype)


def _pick_tile(n, requested_tn):
    """Row-tile size: multiple of 8 (or == N), capped at the request, and kept
    to >= 2 grid blocks when N is large enough so the parallel grid axis can
    shard over v7x's two TensorCores."""
    if n < 16:
        return n                              # single block == full row extent
    n8 = _round_up(n, 8)
    tile = min(_round_up(requested_tn, 8), n8)
    if tile >= n8:                            # everything fit in one block
        tile = _round_up(pl.cdiv(n8, 2), 8)   # -> split into two parallel blocks
    return tile


def lane_encoder(lanes, road_table, lane_table, *, tn=4096):
    """Pallas wrapper.

    lanes      : [N, F] float32 (last two columns = road_id, lane_id as floats)
    road_table : [R, E] float
    lane_table : [L, E] float
    returns    : [N, (F - 2) + E] float32
    """
    n, f = lanes.shape
    r, e = road_table.shape
    l = lane_table.shape[0]
    assert lane_table.shape[1] == e
    n_keep = f - 2
    out_dim = n_keep + e

    # Tiny one-time parameter prep (a couple of KiB).
    table = jnp.concatenate([road_table, lane_table], axis=0)     # [R+L, E]

    tile = _pick_tile(n, tn)
    grid = (pl.cdiv(n, tile),)        # ragged last block handled by Pallas

    kernel = functools.partial(
        _lane_encoder_kernel, n_keep=n_keep, r_vocab=r, l_vocab=l)

    return pl.pallas_call(
        kernel,
        out_shape=jax.ShapeDtypeStruct((n, out_dim), lanes.dtype),
        grid_spec=pltpu.PrefetchScalarGridSpec(
            num_scalar_prefetch=0,
            grid=grid,
            in_specs=[
                pl.BlockSpec((tile, f), lambda i: (i, 0)),
                pl.BlockSpec(table.shape, lambda i: (0, 0)),
            ],
            out_specs=pl.BlockSpec((tile, out_dim), lambda i: (i, 0)),
        ),
        compiler_params=pltpu.CompilerParams(
            dimension_semantics=("parallel",),
            vmem_limit_bytes=32 * 1024 * 1024,
        ),
    )(lanes, table)


def _reference(lanes, road_table, lane_table):
    road = road_table[lanes[:, -2].astype(jnp.int32)]
    lane = lane_table[lanes[:, -1].astype(jnp.int32)]
    return jnp.concatenate([lanes[:, :-2], road + lane], axis=1)


if __name__ == "__main__":
    # Small, deterministic example consistent with the module:
    #   len(Lane()) = F = 10, num_feature = 32  =>  E = 32 - 10 + 2 = 24
    F = 10
    NUM_FEATURE = 32
    E = NUM_FEATURE - F + 2           # 24
    R_VOCAB, L_VOCAB = 16, 8

    def make_inputs(key, n):
        k_feat, k_rid, k_lid = jax.random.split(key, 3)
        feats = jax.random.normal(k_feat, (n, F - 2), dtype=jnp.float32)
        road_ids = jax.random.randint(k_rid, (n, 1), 0, R_VOCAB).astype(jnp.float32)
        lane_ids = jax.random.randint(k_lid, (n, 1), 0, L_VOCAB).astype(jnp.float32)
        return jnp.concatenate([feats, road_ids, lane_ids], axis=1)   # [n, F]

    key = jax.random.PRNGKey(0)
    k_in1, k_in2, k_in3, k_rtab, k_ltab = jax.random.split(key, 5)

    # Deterministic "OpenDriveEncoder" parameters (embedding tables).
    road_table = jax.random.normal(k_rtab, (R_VOCAB, E), dtype=jnp.float32)
    lane_table = jax.random.normal(k_ltab, (L_VOCAB, E), dtype=jnp.float32)

    # Case 1: tiny batch (single full block, no ragged edge).
    lanes1 = make_inputs(k_in1, 8)
    out1 = jax.block_until_ready(lane_encoder(lanes1, road_table, lane_table))
    assert out1.shape == (8, NUM_FEATURE)
    assert jnp.allclose(out1, _reference(lanes1, road_table, lane_table), atol=1e-5)

    # Case 2: explicit small tile -> multi-step grid with a ragged last block
    # (N=40, TN=16 -> grid of 3, last block half out-of-bounds).
    lanes2 = make_inputs(k_in2, 40)
    out2 = jax.block_until_ready(lane_encoder(lanes2, road_table, lane_table, tn=16))
    assert out2.shape == (40, NUM_FEATURE)
    assert jnp.allclose(out2, _reference(lanes2, road_table, lane_table), atol=1e-5)

    # Case 3: default tile -> auto-split into 2 parallel blocks (v7x megacore
    # path) with a ragged last block.
    lanes3 = make_inputs(k_in3, 1000)
    out3 = jax.block_until_ready(lane_encoder(lanes3, road_table, lane_table))
    assert out3.shape == (1000, NUM_FEATURE)
    assert jnp.allclose(out3, _reference(lanes3, road_table, lane_table), atol=1e-5)

    print("KERNEL_OK")
</pallas_src>

<mosaic_0001>
module attributes {stable_mosaic.version = 11 : i64} {
  func.func @_lane_encoder_kernel(%arg0: i32, %arg1: memref<8x10xf32, #tpu.memory_space<vmem>>, %arg2: memref<24x24xf32, #tpu.memory_space<vmem>>, %arg3: memref<8x32xf32, #tpu.memory_space<vmem>>) attributes {dimension_semantics = [#tpu.dimension_semantics<parallel>], iteration_bounds = array<i64: 1>, scalar_prefetch = 0 : i64, scratch_operands = 0 : i64, tpu.core_type = #tpu.core_type<tc>, window_params = [{transform_indices = @transform_0, window_bounds = array<i64: 8, 10>}, {pipeline_mode = #tpu.pipeline_mode<synchronous>, transform_indices = @transform_1, window_bounds = array<i64: 24, 24>}, {transform_indices = @transform_2, window_bounds = array<i64: 8, 32>}]} {
    %c0 = arith.constant 0 : index
    %c0_0 = arith.constant 0 : index
    %0 = vector.load %arg1[%c0, %c0_0] : memref<8x10xf32, #tpu.memory_space<vmem>>, vector<8x10xf32>
    %1 = vector.extract_strided_slice %0 {offsets = [0, 8], sizes = [8, 1], strides = [1, 1]} : vector<8x10xf32> to vector<8x1xf32>
    %2 = arith.fptosi %1 : vector<8x1xf32> to vector<8x1xi32>
    %c0_i32 = arith.constant 0 : i32
    %c15_i32 = arith.constant 15 : i32
    %3 = vector.broadcast %c0_i32 : i32 to vector<8x1xi32>
    %4 = arith.maxsi %3, %2 : vector<8x1xi32>
    %5 = vector.broadcast %c15_i32 : i32 to vector<8x1xi32>
    %6 = arith.minsi %5, %4 : vector<8x1xi32>
    %7 = vector.extract_strided_slice %0 {offsets = [0, 9], sizes = [8, 1], strides = [1, 1]} : vector<8x10xf32> to vector<8x1xf32>
    %8 = arith.fptosi %7 : vector<8x1xf32> to vector<8x1xi32>
    %c0_i32_1 = arith.constant 0 : i32
    %c7_i32 = arith.constant 7 : i32
    %9 = vector.broadcast %c0_i32_1 : i32 to vector<8x1xi32>
    %10 = arith.maxsi %9, %8 : vector<8x1xi32>
    %11 = vector.broadcast %c7_i32 : i32 to vector<8x1xi32>
    %12 = arith.minsi %11, %10 : vector<8x1xi32>
    %c16_i32 = arith.constant 16 : i32
    %13 = vector.broadcast %c16_i32 : i32 to vector<8x1xi32>
    %14 = arith.addi %12, %13 : vector<8x1xi32>
    %15 = tpu.iota {dimensions = array<i32: 1>} : vector<8x24xi32>
    %16 = vector.broadcast %6 : vector<8x1xi32> to vector<8x24xi32>
    %17 = arith.cmpi eq, %16, %15 : vector<8x24xi32>
    %18 = vector.broadcast %14 : vector<8x1xi32> to vector<8x24xi32>
    %19 = arith.cmpi eq, %18, %15 : vector<8x24xi32>
    %20 = arith.ori %17, %19 : vector<8x24xi1>
    %21 = arith.extui %20 : vector<8x24xi1> to vector<8x24xi32>
    %22 = arith.sitofp %21 : vector<8x24xi32> to vector<8x24xf32>
    %c0_2 = arith.constant 0 : index
    %c0_3 = arith.constant 0 : index
    %23 = vector.load %arg2[%c0_2, %c0_3] : memref<24x24xf32, #tpu.memory_space<vmem>>, vector<24x24xf32>
    %cst = arith.constant dense<0.000000e+00> : vector<8x24xf32>
    %24 = tpu.matmul %22, %23, %cst {dimension_numbers = #tpu.dot_dimension_numbers<[1], [0], [0], [1], [0, 0, 1, 1], [], []>} : vector<8x24xf32>, vector<24x24xf32>, vector<8x24xf32> -> vector<8x24xf32>
    %25 = vector.extract_strided_slice %0 {offsets = [0, 0], sizes = [8, 8], strides = [1, 1]} : vector<8x10xf32> to vector<8x8xf32>
    %c0_4 = arith.constant 0 : index
    %c0_5 = arith.constant 0 : index
    %26 = vector.load %arg3[%c0_4, %c0_5] : memref<8x32xf32, #tpu.memory_space<vmem>>, vector<8x8xf32>
    tpu.vector_store %arg3[%c0_4, %c0_5], %25 {strides = array<i32>} : memref<8x32xf32, #tpu.memory_space<vmem>>, vector<8x8xf32>,
    %c0_6 = arith.constant 0 : index
    %c8 = arith.constant 8 : index
    %27 = vector.load %arg3[%c0_6, %c8] : memref<8x32xf32, #tpu.memory_space<vmem>>, vector<8x24xf32>
    tpu.vector_store %arg3[%c0_6, %c8], %24 {strides = array<i32>} : memref<8x32xf32, #tpu.memory_space<vmem>>, vector<8x24xf32>,
    return
  }
  func.func @transform_0(%arg0: i32) -> (i32, i32) {
    %c0_i32 = arith.constant 0 : i32
    %c0_i32_0 = arith.constant 0 : i32
    return %arg0, %c0_i32 : i32, i32
  }
  func.func @transform_1(%arg0: i32) -> (i32, i32) {
    %c0_i32 = arith.constant 0 : i32
    %c0_i32_0 = arith.constant 0 : i32
    %c0_i32_1 = arith.constant 0 : i32
    return %c0_i32, %c0_i32_0 : i32, i32
  }
  func.func @transform_2(%arg0: i32) -> (i32, i32) {
    %c0_i32 = arith.constant 0 : i32
    %c0_i32_0 = arith.constant 0 : i32
    return %arg0, %c0_i32 : i32, i32
  }
}

</mosaic_0001>

<llo_original>
// kernel: tpu_custom_call.1
$region0: #{tpu_custom_call.1}
  #allocation0 [shape = 'u32[]', space=smem, size = 0x4, offset = 0x4, fixed_abs, tag = 'smem constant byte address 0x4 - core index']
  #allocation1 [shape = 'u32[144,128]{1,0:T(1,128)}', space=vmem, size = 0x12000, scoped, tag = 'internal scratch']
  %s0 = inlined_call_operand.hbm [shape: f32[8,10], index: 0, kind: input, shape index: {}]
  %s1 = inlined_call_operand.hbm [shape: f32[24,24], index: 1, kind: input, shape index: {}]
  %s2 = inlined_call_operand.hbm [shape: f32[8,32], index: 2, kind: output, shape index: {}]
  %s3 = sld [smem:[#allocation0]]
  $region26: #{tpu_custom_call.1} parent=0
    _
  %s5 = ssub.s32 1, %s3
  %s6 = scalar_select 0, %s5, %s3
  $region1: #{tpu_custom_call.1} parent=0
    #allocation2 [shape = 'u8[4096]{0}', space=vmem, size = 0x1000, scoped, tag = 'input window, operand 0, single buffered']
    #allocation3 [shape = 's32[1]{0}', space=sflag, size = 0x4, scoped, tag = 'scoped memory for tpu_custom_call.1']
    #allocation4 [shape = 's32[1]{0}', space=sflag, size = 0x4, scoped, tag = 'scoped memory for tpu_custom_call.1']
    #allocation5 [shape = 'u8[12288]{0}', space=vmem, size = 0x3000, scoped, tag = 'input window, operand 1, single buffered']
    #allocation6 [shape = 's32[1]{0}', space=sflag, size = 0x4, scoped, tag = 'scoped memory for tpu_custom_call.1']
    #allocation7 [shape = 'u8[4096]{0}', space=vmem, size = 0x1000, scoped, tag = 'output window, operand 0, single buffered']
    %7 = vsyncpa [#allocation3], 0
    %8 = vsyncpa [#allocation6], 0
    %9 = vsyncpa [#allocation4], 0
    // Predicated region
    $region2: #{tpu_custom_call.1} parent=1 // pred_check
      _
    $region3: #{tpu_custom_call.1} parent=1 // pred_check_branch
      %11 = sbr.rel (0) target = $region5
    $region4: #{tpu_custom_call.1} parent=1 // pred_region
      %s13 = ssub.s32 128, 128
      %14 = vsyncadd [#allocation3], %s13
      %s16 = sshll.u32 [#allocation2], 4
      %s17 = int_to_ptr.vmem [resolvable:$true] %s16
      %19 = dma.hbm_to_vmem [thread:$0]  %s0, 128, %s17, [#allocation3]
    $region5: #{tpu_custom_call.1} parent=1 // pred_fallthru
      _
    // Predicated region
    $region6: #{tpu_custom_call.1} parent=1 // pred_check
      _
    $region7: #{tpu_custom_call.1} parent=1 // pred_check_branch
      %21 = sbr.rel (0) target = $region9
    $region8: #{tpu_custom_call.1} parent=1 // pred_region
      %s23 = ssub.s32 384, 384
      %24 = vsyncadd [#allocation6], %s23
      %s25 = sshll.u32 [#allocation5], 4
      %s26 = int_to_ptr.vmem [resolvable:$true] %s25
      %31 = dma.hbm_to_vmem [thread:$0]  %s1, 384, %s26, [#allocation6], 128, 128, 8
    $region9: #{tpu_custom_call.1} parent=1 // pred_fallthru
      _
    // Predicated region
    $region10: #{tpu_custom_call.1} parent=1 // pred_check
      _
    $region11: #{tpu_custom_call.1} parent=1 // pred_check_branch
      %33 = sbr.rel (0) target = $region13
    $region12: #{tpu_custom_call.1} parent=1 // pred_region
      %34 = dma.done [#allocation3], 128
    $region13: #{tpu_custom_call.1} parent=1 // pred_fallthru
      _
    // Predicated region
    $region14: #{tpu_custom_call.1} parent=1 // pred_check
      _
    $region15: #{tpu_custom_call.1} parent=1 // pred_check_branch
      %36 = sbr.rel (0) target = $region17
    $region16: #{tpu_custom_call.1} parent=1 // pred_region
      %37 = dma.done [#allocation6], 384
    $region17: #{tpu_custom_call.1} parent=1 // pred_fallthru
      _
    %v38 = vld [vmem:[#allocation2] sm:$0xff]
    %v39 = vcvt.f32.s32.to.zero.pseudo %v38
    %vm40 = vcmp.gt.s32.totalorder %v39, 0
    %v41 = vsel %vm40, %v39, 0
    %vm42 = vcmp.lt.s32.totalorder %v41, 15
    %v43 = vsel %vm42, %v41, 15
    %vm44 = vcmp.lt.s32.totalorder %v41, 7
    %v45 = vsel %vm44, %v41, 7
    %v46 = vadd.s32 %v45, 16
    %v47 = vlaneseq
    %v48 = vand.u32 %v47, 127
    %49 = vset.pattern.permute.xlu0 8
    %50 = vperm.xlu0 %49, %v43
    %v51 = vpop.permute.xlu0 %50
    %vm52 = vcmp.eq.s32.totalorder %v51, %v48
    %53 = vset.pattern.permute.xlu0 9
    %54 = vperm.xlu0 %53, %v46
    %v55 = vpop.permute.xlu0 %54
    %vm56 = vcmp.eq.s32.totalorder %v55, %v48
    %vm57 = vmor %vm52, %vm56
    %v58 = vsel %vm57, 1, 0
    %v59 = vcvt.s32.f32 %v58
    %v60 = vld [vmem:[#allocation5] sm:$0xff]
    %v61 = vld [vmem:[#allocation5 + $0x8] sm:$0xff]
    %v62 = vld [vmem:[#allocation5 + $0x10] sm:$0xff]
    %vm63 = vcmask 195584
    %v65 = vsel %vm63, %v59, 0
    %67 = vmatprep.subr.mxu0 0.0
    %68 = vmatpush1.msra.mxu0 %v60
    %69 = vmatprep.subr.mxu0 0.0
    %70 = vmatpush1.msra.mxu0 %v61
    %71 = vmatprep.subr.mxu0 0.0
    %72 = vmatpush1.msra.mxu0 %v62
    %73 = vmatprep.subr.mxu0 0.0
    %74 = vmatpush1.msra.mxu0 0.0
    %75 = vmatprep.subr.mxu0 0.0
    %76 = vmatpush1.msra.mxu0 0.0
    %77 = vmatprep.subr.mxu0 0.0
    %78 = vmatpush1.msra.mxu0 0.0
    %79 = vmatprep.subr.mxu0 0.0
    %80 = vmatpush1.msra.mxu0 0.0
    %81 = vmatprep.subr.mxu0 0.0
    %82 = vmatpush1.msra.mxu0 0.0
    %83 = vmatprep.subr.mxu0 0.0
    %84 = vmatpush1.msra.mxu0 0.0
    %85 = vmatprep.subr.mxu0 0.0
    %86 = vmatpush1.msra.mxu0 0.0
    %87 = vmatprep.subr.mxu0 0.0
    %88 = vmatpush1.msra.mxu0 0.0
    %89 = vmatprep.subr.mxu0 0.0
    %90 = vmatpush1.msra.mxu0 0.0
    %91 = vmatprep.subr.mxu0 0.0
    %92 = vmatpush1.msra.mxu0 0.0
    %93 = vmatprep.subr.mxu0 0.0
    %94 = vmatpush1.msra.mxu0 0.0
    %95 = vmatprep.subr.mxu0 0.0
    %96 = vmatpush1.msra.mxu0 0.0
    %97 = vmatprep.subr.mxu0 0.0
    %98 = vmatpush1.msra.mxu0 0.0
    %99 = vmatprep.subr.mxu0 0.0
    %100 = vmatpush1.msra.mxu0 0.0
    %101 = vmatprep.subr.mxu0 0.0
    %102 = vmatpush1.msra.mxu0 0.0
    %103 = vmatprep.subr.mxu0 0.0
    %104 = vmatpush1.msra.mxu0 0.0
    %105 = vmatprep.subr.mxu0 0.0
    %106 = vmatpush1.msra.mxu0 0.0
    %107 = vmatprep.subr.mxu0 0.0
    %108 = vmatpush1.msra.mxu0 0.0
    %109 = vmatprep.subr.mxu0 0.0
    %110 = vmatpush1.msra.mxu0 0.0
    %111 = vmatprep.subr.mxu0 0.0
    %112 = vmatpush1.msra.mxu0 0.0
    %113 = vmatprep.subr.mxu0 0.0
    %114 = vmatpush1.msra.mxu0 0.0
    %115 = vmatprep.subr.mxu0 0.0
    %116 = vmatpush1.msra.mxu0 0.0
    %117 = vmatprep.subr.mxu0 0.0
    %118 = vmatpush1.msra.mxu0 0.0
    %119 = vmatprep.subr.mxu0 0.0
    %120 = vmatpush1.msra.mxu0 0.0
    %121 = vmatprep.subr.mxu0 0.0
    %122 = vmatpush1.msra.mxu0 0.0
    %123 = vmatprep.subr.mxu0 0.0
    %124 = vmatpush1.msra.mxu0 0.0
    %125 = vmatprep.subr.mxu0 0.0
    %126 = vmatpush1.msra.mxu0 0.0
    %127 = vmatprep.subr.mxu0 0.0
    %128 = vmatpush1.msra.mxu0 0.0
    %129 = vmatprep.subr.mxu0 0.0
    %130 = vmatpush1.msra.mxu0 0.0
    %131 = vmatprep.mubr.f32.mxu0 0.0
    %132 = vmatmul.mubr.f32.gmra.mrb[0].mxu0 %v65
    %v133 = vpop.f32.mrb[0].mxu0
    %v134 = vadd.f32 0.0, %v133
    %v135 = vpop.f32.mrb[0].mxu0
    %136 = vdwg.mxu0
    %vm137 = vcmask 64512
    %138 = vst.msk [vmem:[#allocation7] sm:$0xff] %vm137, %v38
    %140 = vrot.lane.b32.xlu0 %v134, 8
    %v141 = vpop.permute.xlu0 %140
    %vm143 = vcmask 261184
    %144 = vst.msk [vmem:[#allocation7] sm:$0xff] %vm143, %v141
    // Predicated region
    $region18: #{tpu_custom_call.1} parent=1 // pred_check
      _
    $region19: #{tpu_custom_call.1} parent=1 // pred_check_branch
      %146 = sbr.rel (0) target = $region21
    $region20: #{tpu_custom_call.1} parent=1 // pred_region
      %s148 = ssub.s32 128, 128
      %149 = vsyncadd [#allocation4], %s148
      %s151 = sshll.u32 [#allocation7], 4
      %s152 = int_to_ptr.vmem [resolvable:$true] %s151
      %154 = dma.vmem_to_hbm [thread:$0]  %s152, 128, %s2, [#allocation4]
    $region21: #{tpu_custom_call.1} parent=1 // pred_fallthru
      _
    // Predicated region
    $region22: #{tpu_custom_call.1} parent=1 // pred_check
      _
    $region23: #{tpu_custom_call.1} parent=1 // pred_check_branch
      %156 = sbr.rel (0) target = $region25
    $region24: #{tpu_custom_call.1} parent=1 // pred_region
      %157 = dma.done [#allocation4], 128
    $region25: #{tpu_custom_call.1} parent=1 // pred_fallthru
      _
    %158 = vsyncpa [#allocation3], 1
    %159 = vsyncpa [#allocation6], 1
    %160 = vsyncpa [#allocation4], 1

</llo_original>
